<compile_context>
chip_gen: v6e
topology: v6e:2x2x1
jax: 0.10.0
libtpu: 0.0.40
codegen_flags: <defaults>
</compile_context>

<pallas_src>
import functools

import jax
import jax.numpy as jnp
from jax.experimental import pallas as pl
from jax.experimental.pallas import tpu as pltpu


def _ggfuse_kernel(w_ref, b_ref, g_ref, s_ref, d_ref, o_ref, *, cp, use_mxu):
    """One (cp, tile) pixel tile of the fused GGFuse forward.

    w_ref : (4*cp, cp) folded conv+BN weights (wg, ws, wd, wf stacked;
            block-diagonal per packed image when batch packing is enabled).
    b_ref : (cp, 6) per-channel columns: 0..3 = folded conv biases,
            4 = final-BN scale, 5 = final-BN shift.
    g/s/d : (1, cp, tile) pixel tiles, channels on sublanes, pixels on lanes.
    """
    g = g_ref[0].astype(jnp.float32)
    s = s_ref[0].astype(jnp.float32)
    d = d_ref[0].astype(jnp.float32)
    w = w_ref[...].astype(jnp.float32)
    b = b_ref[...].astype(jnp.float32)

    def conv_bn_relu(i, x):
        wi = w[i * cp:(i + 1) * cp, :]                       # (cp, cp)
        if use_mxu:
            y = jnp.dot(wi, x, preferred_element_type=jnp.float32)
        else:
            # Tiny channel count: unrolled per-input-channel FMAs on the VPU.
            # Weight column broadcasts over lanes, input row over sublanes;
            # every intermediate stays a dense (cp, tile) tile.
            y = wi[:, 0:1] * jnp.broadcast_to(x[0:1, :], x.shape)
            for ci in range(1, cp):
                y = y + wi[:, ci:ci + 1] * jnp.broadcast_to(
                    x[ci:ci + 1, :], x.shape)
        return jnp.maximum(y + b[:, i:i + 1], 0.0)

    att = jax.nn.sigmoid(conv_bn_relu(0, g))                 # exp on the EUP
    p_add = conv_bn_relu(1, s * att)
    i_add = conv_bn_relu(2, d * (1.0 - att))
    f = conv_bn_relu(3, p_add + i_add)
    out = jnp.maximum(b[:, 4:5] * (f + g) + b[:, 5:6], 0.0)  # final BN + ReLU
    o_ref[...] = out[None].astype(o_ref.dtype)


def _vmem_limit_bytes():
    """Generation-aware scoped-VMEM limit: ~3/4 of physical, capped at 100 MiB.

    v5e/v6e (128 MiB physical) -> ~96 MiB; v7x (64 MiB physical) -> 48 MiB.
    """
    phys = 64 * 1024 * 1024                      # conservative fallback (v7x)
    try:
        info = pltpu.get_tpu_info()
        phys = int(getattr(info, "vmem_capacity_bytes", phys))
    except Exception:
        pass
    return int(min((phys * 3) // 4, 100 * 1024 * 1024))


def ggfuse_pallas(g, s, d, params, *, eps=1e-5, max_tile_hw=32768):
    """Fused GGFuse forward.

    g, s, d : (N, C_in, H, W) NCHW inputs (f32 or bf16 — passed through).
    params  : dict of conv weights/biases and BN (gamma, beta, mean, var).
    returns : (N, C_out, H, W)
    """
    n, c_in, h, w_sp = g.shape
    c = params["wg"].shape[0]
    if c != c_in:
        raise ValueError("GGFuse residual `+ g` requires out_channels == in_channels")
    hw = h * w_sp
    f32 = jnp.float32

    # ---- Fold BatchNorm (inference mode) into each 1x1 conv: y = W' x + b'.
    def fold(w, b, gamma, beta, mean, var):
        scale = (gamma.astype(f32) / jnp.sqrt(var.astype(f32) + eps))
        w_f = w.astype(f32) * scale[:, None]
        b_f = (b.astype(f32) - mean.astype(f32)) * scale + beta.astype(f32)
        return w_f, b_f

    wg, bg = fold(params["wg"], params["bg"], params["g_gamma"], params["g_beta"],
                  params["g_mean"], params["g_var"])
    ws, bs = fold(params["ws"], params["bs"], params["s_gamma"], params["s_beta"],
                  params["s_mean"], params["s_var"])
    wd, bd = fold(params["wd"], params["bd"], params["d_gamma"], params["d_beta"],
                  params["d_mean"], params["d_var"])
    wf, bf = fold(params["wf"], params["bf"], params["f_gamma"], params["f_beta"],
                  params["f_mean"], params["f_var"])
    nscale = params["n_gamma"].astype(f32) / jnp.sqrt(params["n_var"].astype(f32) + eps)
    nshift = params["n_beta"].astype(f32) - nscale * params["n_mean"].astype(f32)

    # ---- Batch -> sublane packing when C < 8: fold `pack` images into the
    # channel axis (pure reshape of contiguous NCHW) so all 8 f32 sublanes are
    # used.  Weights become block-diagonal per image so images never mix.
    pack = 1
    if c < 8:
        for cand in (8 // c, 4, 2):
            if 1 < cand <= 8 // c and n % cand == 0:
                pack = cand
                break
    cp = pack * c
    n_p = n // pack
    use_mxu = cp > 32                                 # MXU only for large C

    def pk_w(w):
        return jnp.kron(jnp.eye(pack, dtype=f32), w) if pack > 1 else w

    def pk_v(v):
        return jnp.tile(v, pack) if pack > 1 else v

    w_all = jnp.concatenate([pk_w(wg), pk_w(ws), pk_w(wd), pk_w(wf)], axis=0)
    b_all = jnp.stack([pk_v(bg), pk_v(bs), pk_v(bd), pk_v(bf),
                       pk_v(nscale), pk_v(nshift)], axis=1)

    gv = g.reshape(n_p, cp, hw)                       # pure reshapes, no copy
    sv = s.reshape(n_p, cp, hw)
    dv = d.reshape(n_p, cp, hw)

    # ---- Pixel tile from the VMEM budget: 4 streamed tensors double-buffered
    # plus ~12 live f32 (cp, t) intermediates must fit in ~2/3 of the limit.
    vmem_limit = _vmem_limit_bytes()
    itemsize = jnp.dtype(g.dtype).itemsize
    per_col = 2 * 4 * cp * itemsize + 12 * cp * 4
    t = ((vmem_limit * 2 // 3) // per_col // 128) * 128
    t = max(128, min(t, max_tile_hw))
    if hw <= t:
        t = hw                                        # whole image per step
    if n_p == 1 and hw >= 512 and t >= hw:
        # v7x has two TensorCores: keep >= 2 blocks on the parallel pixel axis.
        t = ((hw + 1) // 2 + 127) // 128 * 128
    num_t = pl.cdiv(hw, t)

    pix_spec = pl.BlockSpec((1, cp, t), lambda bi, ti: (bi, 0, ti))
    w_spec = pl.BlockSpec(w_all.shape, lambda bi, ti: (0, 0))
    b_spec = pl.BlockSpec(b_all.shape, lambda bi, ti: (0, 0))

    cost = pl.CostEstimate(
        flops=int(2 * n_p * hw * cp * cp * 4 + 12 * n_p * hw * cp),
        transcendentals=int(n_p * hw * cp),
        bytes_accessed=int(itemsize * 4 * n_p * cp * hw),
    )

    kernel = functools.partial(_ggfuse_kernel, cp=cp, use_mxu=use_mxu)

    y = pl.pallas_call(
        kernel,
        out_shape=jax.ShapeDtypeStruct((n_p, cp, hw), g.dtype),
        grid_spec=pltpu.PrefetchScalarGridSpec(
            num_scalar_prefetch=0,
            grid=(n_p, num_t),
            in_specs=[w_spec, b_spec, pix_spec, pix_spec, pix_spec],
            out_specs=pix_spec,
        ),
        compiler_params=pltpu.CompilerParams(
            dimension_semantics=("parallel", "parallel"),
            vmem_limit_bytes=vmem_limit),
        cost_estimate=cost,
    )(w_all, b_all, gv, sv, dv)

    return y.reshape(n, c, h, w_sp)


if __name__ == "__main__":
    # GGFuse needs out_channels == in_channels for the `+ g` residual.
    N, C_IN, C_OUT, H, W = 2, 4, 4, 16, 16
    EPS = 1e-5

    keys = iter(jax.random.split(jax.random.PRNGKey(0), 40))

    def nrm(shape):
        return jax.random.normal(next(keys), shape, dtype=jnp.float32)

    g = nrm((N, C_IN, H, W))
    s = nrm((N, C_IN, H, W))
    d = nrm((N, C_IN, H, W))

    def conv_init(c_out, c_in):
        fan_in = c_in  # 1x1 kernel
        bound_w = (6.0 / fan_in) ** 0.5 / (3.0 ** 0.5)  # kaiming_uniform a=sqrt(5)
        bound_b = 1.0 / (fan_in ** 0.5)
        w = jax.random.uniform(next(keys), (c_out, c_in), jnp.float32,
                               minval=-bound_w, maxval=bound_w)
        b = jax.random.uniform(next(keys), (c_out,), jnp.float32,
                               minval=-bound_b, maxval=bound_b)
        return w, b

    def bn_init(c):
        gamma = 1.0 + 0.1 * jax.random.normal(next(keys), (c,), jnp.float32)
        beta = 0.1 * jax.random.normal(next(keys), (c,), jnp.float32)
        mean = 0.1 * jax.random.normal(next(keys), (c,), jnp.float32)
        var = jnp.abs(jax.random.normal(next(keys), (c,), jnp.float32)) + 0.5
        return gamma, beta, mean, var

    params = {}
    params["wg"], params["bg"] = conv_init(C_OUT, C_IN)
    params["g_gamma"], params["g_beta"], params["g_mean"], params["g_var"] = bn_init(C_OUT)
    params["ws"], params["bs"] = conv_init(C_OUT, C_IN)
    params["s_gamma"], params["s_beta"], params["s_mean"], params["s_var"] = bn_init(C_OUT)
    params["wd"], params["bd"] = conv_init(C_OUT, C_IN)
    params["d_gamma"], params["d_beta"], params["d_mean"], params["d_var"] = bn_init(C_OUT)
    params["wf"], params["bf"] = conv_init(C_OUT, C_OUT)
    params["f_gamma"], params["f_beta"], params["f_mean"], params["f_var"] = bn_init(C_OUT)
    params["n_gamma"], params["n_beta"], params["n_mean"], params["n_var"] = bn_init(C_OUT)

    y = ggfuse_pallas(g, s, d, params, eps=EPS)
    jax.block_until_ready(y)

    # ---- Pure-JAX reference (unfused, eval-mode BN) -------------------------
    def conv1x1(x, w, b):
        return jnp.einsum("nchw,oc->nohw", x, w,
                          precision=jax.lax.Precision.HIGHEST) \
            + b[None, :, None, None]

    def bn(x, gamma, beta, mean, var):
        inv = gamma / jnp.sqrt(var + EPS)
        return inv[None, :, None, None] * (x - mean[None, :, None, None]) \
            + beta[None, :, None, None]

    def cbr(x, w, b, gm, bt, mn, vr):
        return jnp.maximum(bn(conv1x1(x, w, b), gm, bt, mn, vr), 0.0)

    att = 1.0 / (1.0 + jnp.exp(-cbr(g, params["wg"], params["bg"],
                                    params["g_gamma"], params["g_beta"],
                                    params["g_mean"], params["g_var"])))
    p_add = cbr(s * att, params["ws"], params["bs"],
                params["s_gamma"], params["s_beta"], params["s_mean"], params["s_var"])
    i_add = cbr(d * (1.0 - att), params["wd"], params["bd"],
                params["d_gamma"], params["d_beta"], params["d_mean"], params["d_var"])
    f = cbr(p_add + i_add, params["wf"], params["bf"],
            params["f_gamma"], params["f_beta"], params["f_mean"], params["f_var"])
    y_ref = jnp.maximum(bn(f + g, params["n_gamma"], params["n_beta"],
                           params["n_mean"], params["n_var"]), 0.0)

    assert y.shape == (N, C_OUT, H, W)
    assert jnp.allclose(y, y_ref, atol=1e-4, rtol=1e-4)

    print("KERNEL_OK")
</pallas_src>

<mosaic_0001>
module attributes {stable_mosaic.version = 11 : i64} {
  func.func @_ggfuse_kernel(%arg0: i32, %arg1: i32, %arg2: memref<32x8xf32, #tpu.memory_space<vmem>>, %arg3: memref<8x6xf32, #tpu.memory_space<vmem>>, %arg4: memref<1x8x256xf32, #tpu.memory_space<vmem>>, %arg5: memref<1x8x256xf32, #tpu.memory_space<vmem>>, %arg6: memref<1x8x256xf32, #tpu.memory_space<vmem>>, %arg7: memref<1x8x256xf32, #tpu.memory_space<vmem>>) attributes {dimension_semantics = [#tpu.dimension_semantics<parallel>, #tpu.dimension_semantics<parallel>], iteration_bounds = array<i64: 1, 1>, scalar_prefetch = 0 : i64, scratch_operands = 0 : i64, tpu.core_type = #tpu.core_type<tc>, window_params = [{pipeline_mode = #tpu.pipeline_mode<synchronous>, transform_indices = @transform_0, window_bounds = array<i64: 32, 8>}, {pipeline_mode = #tpu.pipeline_mode<synchronous>, transform_indices = @transform_1, window_bounds = array<i64: 8, 6>}, {transform_indices = @transform_2, window_bounds = array<i64: 1, 8, 256>}, {transform_indices = @transform_3, window_bounds = array<i64: 1, 8, 256>}, {transform_indices = @transform_4, window_bounds = array<i64: 1, 8, 256>}, {transform_indices = @transform_5, window_bounds = array<i64: 1, 8, 256>}]} {
    %c0 = arith.constant 0 : index
    %c0_0 = arith.constant 0 : index
    %c0_1 = arith.constant 0 : index
    %0 = vector.load %arg4[%c0, %c0_0, %c0_1] : memref<1x8x256xf32, #tpu.memory_space<vmem>>, vector<1x8x256xf32>
    %1 = vector.shape_cast %0 : vector<1x8x256xf32> to vector<8x256xf32>
    %c0_2 = arith.constant 0 : index
    %c0_3 = arith.constant 0 : index
    %c0_4 = arith.constant 0 : index
    %2 = vector.load %arg5[%c0_2, %c0_3, %c0_4] : memref<1x8x256xf32, #tpu.memory_space<vmem>>, vector<1x8x256xf32>
    %3 = vector.shape_cast %2 : vector<1x8x256xf32> to vector<8x256xf32>
    %c0_5 = arith.constant 0 : index
    %c0_6 = arith.constant 0 : index
    %c0_7 = arith.constant 0 : index
    %4 = vector.load %arg6[%c0_5, %c0_6, %c0_7] : memref<1x8x256xf32, #tpu.memory_space<vmem>>, vector<1x8x256xf32>
    %5 = vector.shape_cast %4 : vector<1x8x256xf32> to vector<8x256xf32>
    %c0_8 = arith.constant 0 : index
    %c0_9 = arith.constant 0 : index
    %6 = vector.load %arg2[%c0_8, %c0_9] : memref<32x8xf32, #tpu.memory_space<vmem>>, vector<32x8xf32>
    %c0_10 = arith.constant 0 : index
    %c0_11 = arith.constant 0 : index
    %7 = vector.load %arg3[%c0_10, %c0_11] : memref<8x6xf32, #tpu.memory_space<vmem>>, vector<8x6xf32>
    %8 = vector.extract_strided_slice %6 {offsets = [0, 0], sizes = [8, 8], strides = [1, 1]} : vector<32x8xf32> to vector<8x8xf32>
    %9 = vector.extract_strided_slice %8 {offsets = [0, 0], sizes = [8, 1], strides = [1, 1]} : vector<8x8xf32> to vector<8x1xf32>
    %10 = vector.extract_strided_slice %1 {offsets = [0, 0], sizes = [1, 256], strides = [1, 1]} : vector<8x256xf32> to vector<1x256xf32>
    %11 = vector.shape_cast %10 : vector<1x256xf32> to vector<1x256xf32>
    %12 = vector.broadcast %11 : vector<1x256xf32> to vector<8x256xf32>
    %13 = vector.broadcast %9 : vector<8x1xf32> to vector<8x256xf32>
    %14 = arith.mulf %13, %12 : vector<8x256xf32>
    %15 = vector.extract_strided_slice %8 {offsets = [0, 1], sizes = [8, 1], strides = [1, 1]} : vector<8x8xf32> to vector<8x1xf32>
    %16 = vector.extract_strided_slice %1 {offsets = [1, 0], sizes = [1, 256], strides = [1, 1]} : vector<8x256xf32> to vector<1x256xf32>
    %17 = vector.shape_cast %16 : vector<1x256xf32> to vector<1x256xf32>
    %18 = vector.broadcast %17 : vector<1x256xf32> to vector<8x256xf32>
    %19 = vector.broadcast %15 : vector<8x1xf32> to vector<8x256xf32>
    %20 = arith.mulf %19, %18 : vector<8x256xf32>
    %21 = arith.addf %14, %20 : vector<8x256xf32>
    %22 = vector.extract_strided_slice %8 {offsets = [0, 2], sizes = [8, 1], strides = [1, 1]} : vector<8x8xf32> to vector<8x1xf32>
    %23 = vector.extract_strided_slice %1 {offsets = [2, 0], sizes = [1, 256], strides = [1, 1]} : vector<8x256xf32> to vector<1x256xf32>
    %24 = vector.shape_cast %23 : vector<1x256xf32> to vector<1x256xf32>
    %25 = vector.broadcast %24 : vector<1x256xf32> to vector<8x256xf32>
    %26 = vector.broadcast %22 : vector<8x1xf32> to vector<8x256xf32>
    %27 = arith.mulf %26, %25 : vector<8x256xf32>
    %28 = arith.addf %21, %27 : vector<8x256xf32>
    %29 = vector.extract_strided_slice %8 {offsets = [0, 3], sizes = [8, 1], strides = [1, 1]} : vector<8x8xf32> to vector<8x1xf32>
    %30 = vector.extract_strided_slice %1 {offsets = [3, 0], sizes = [1, 256], strides = [1, 1]} : vector<8x256xf32> to vector<1x256xf32>
    %31 = vector.shape_cast %30 : vector<1x256xf32> to vector<1x256xf32>
    %32 = vector.broadcast %31 : vector<1x256xf32> to vector<8x256xf32>
    %33 = vector.broadcast %29 : vector<8x1xf32> to vector<8x256xf32>
    %34 = arith.mulf %33, %32 : vector<8x256xf32>
    %35 = arith.addf %28, %34 : vector<8x256xf32>
    %36 = vector.extract_strided_slice %8 {offsets = [0, 4], sizes = [8, 1], strides = [1, 1]} : vector<8x8xf32> to vector<8x1xf32>
    %37 = vector.extract_strided_slice %1 {offsets = [4, 0], sizes = [1, 256], strides = [1, 1]} : vector<8x256xf32> to vector<1x256xf32>
    %38 = vector.shape_cast %37 : vector<1x256xf32> to vector<1x256xf32>
    %39 = vector.broadcast %38 : vector<1x256xf32> to vector<8x256xf32>
    %40 = vector.broadcast %36 : vector<8x1xf32> to vector<8x256xf32>
    %41 = arith.mulf %40, %39 : vector<8x256xf32>
    %42 = arith.addf %35, %41 : vector<8x256xf32>
    %43 = vector.extract_strided_slice %8 {offsets = [0, 5], sizes = [8, 1], strides = [1, 1]} : vector<8x8xf32> to vector<8x1xf32>
    %44 = vector.extract_strided_slice %1 {offsets = [5, 0], sizes = [1, 256], strides = [1, 1]} : vector<8x256xf32> to vector<1x256xf32>
    %45 = vector.shape_cast %44 : vector<1x256xf32> to vector<1x256xf32>
    %46 = vector.broadcast %45 : vector<1x256xf32> to vector<8x256xf32>
    %47 = vector.broadcast %43 : vector<8x1xf32> to vector<8x256xf32>
    %48 = arith.mulf %47, %46 : vector<8x256xf32>
    %49 = arith.addf %42, %48 : vector<8x256xf32>
    %50 = vector.extract_strided_slice %8 {offsets = [0, 6], sizes = [8, 1], strides = [1, 1]} : vector<8x8xf32> to vector<8x1xf32>
    %51 = vector.extract_strided_slice %1 {offsets = [6, 0], sizes = [1, 256], strides = [1, 1]} : vector<8x256xf32> to vector<1x256xf32>
    %52 = vector.shape_cast %51 : vector<1x256xf32> to vector<1x256xf32>
    %53 = vector.broadcast %52 : vector<1x256xf32> to vector<8x256xf32>
    %54 = vector.broadcast %50 : vector<8x1xf32> to vector<8x256xf32>
    %55 = arith.mulf %54, %53 : vector<8x256xf32>
    %56 = arith.addf %49, %55 : vector<8x256xf32>
    %57 = vector.extract_strided_slice %8 {offsets = [0, 7], sizes = [8, 1], strides = [1, 1]} : vector<8x8xf32> to vector<8x1xf32>
    %58 = vector.extract_strided_slice %1 {offsets = [7, 0], sizes = [1, 256], strides = [1, 1]} : vector<8x256xf32> to vector<1x256xf32>
    %59 = vector.shape_cast %58 : vector<1x256xf32> to vector<1x256xf32>
    %60 = vector.broadcast %59 : vector<1x256xf32> to vector<8x256xf32>
    %61 = vector.broadcast %57 : vector<8x1xf32> to vector<8x256xf32>
    %62 = arith.mulf %61, %60 : vector<8x256xf32>
    %63 = arith.addf %56, %62 : vector<8x256xf32>
    %64 = vector.extract_strided_slice %7 {offsets = [0, 0], sizes = [8, 1], strides = [1, 1]} : vector<8x6xf32> to vector<8x1xf32>
    %65 = vector.broadcast %64 : vector<8x1xf32> to vector<8x256xf32>
    %66 = arith.addf %63, %65 : vector<8x256xf32>
    %cst = arith.constant 0.000000e+00 : f32
    %67 = vector.broadcast %cst : f32 to vector<8x256xf32>
    %68 = arith.maximumf %66, %67 : vector<8x256xf32>
    %69 = arith.negf %68 : vector<8x256xf32>
    %70 = math.exp %69 : vector<8x256xf32>
    %cst_12 = arith.constant 1.000000e+00 : f32
    %71 = vector.broadcast %cst_12 : f32 to vector<8x256xf32>
    %72 = arith.addf %71, %70 : vector<8x256xf32>
    %73 = arith.divf %71, %72 : vector<8x256xf32>
    %74 = arith.mulf %3, %73 : vector<8x256xf32>
    %75 = vector.extract_strided_slice %6 {offsets = [8, 0], sizes = [8, 8], strides = [1, 1]} : vector<32x8xf32> to vector<8x8xf32>
    %76 = vector.extract_strided_slice %75 {offsets = [0, 0], sizes = [8, 1], strides = [1, 1]} : vector<8x8xf32> to vector<8x1xf32>
    %77 = vector.extract_strided_slice %74 {offsets = [0, 0], sizes = [1, 256], strides = [1, 1]} : vector<8x256xf32> to vector<1x256xf32>
    %78 = vector.shape_cast %77 : vector<1x256xf32> to vector<1x256xf32>
    %79 = vector.broadcast %78 : vector<1x256xf32> to vector<8x256xf32>
    %80 = vector.broadcast %76 : vector<8x1xf32> to vector<8x256xf32>
    %81 = arith.mulf %80, %79 : vector<8x256xf32>
    %82 = vector.extract_strided_slice %75 {offsets = [0, 1], sizes = [8, 1], strides = [1, 1]} : vector<8x8xf32> to vector<8x1xf32>
    %83 = vector.extract_strided_slice %74 {offsets = [1, 0], sizes = [1, 256], strides = [1, 1]} : vector<8x256xf32> to vector<1x256xf32>
    %84 = vector.shape_cast %83 : vector<1x256xf32> to vector<1x256xf32>
    %85 = vector.broadcast %84 : vector<1x256xf32> to vector<8x256xf32>
    %86 = vector.broadcast %82 : vector<8x1xf32> to vector<8x256xf32>
    %87 = arith.mulf %86, %85 : vector<8x256xf32>
    %88 = arith.addf %81, %87 : vector<8x256xf32>
    %89 = vector.extract_strided_slice %75 {offsets = [0, 2], sizes = [8, 1], strides = [1, 1]} : vector<8x8xf32> to vector<8x1xf32>
    %90 = vector.extract_strided_slice %74 {offsets = [2, 0], sizes = [1, 256], strides = [1, 1]} : vector<8x256xf32> to vector<1x256xf32>
    %91 = vector.shape_cast %90 : vector<1x256xf32> to vector<1x256xf32>
    %92 = vector.broadcast %91 : vector<1x256xf32> to vector<8x256xf32>
    %93 = vector.broadcast %89 : vector<8x1xf32> to vector<8x256xf32>
    %94 = arith.mulf %93, %92 : vector<8x256xf32>
    %95 = arith.addf %88, %94 : vector<8x256xf32>
    %96 = vector.extract_strided_slice %75 {offsets = [0, 3], sizes = [8, 1], strides = [1, 1]} : vector<8x8xf32> to vector<8x1xf32>
    %97 = vector.extract_strided_slice %74 {offsets = [3, 0], sizes = [1, 256], strides = [1, 1]} : vector<8x256xf32> to vector<1x256xf32>
    %98 = vector.shape_cast %97 : vector<1x256xf32> to vector<1x256xf32>
    %99 = vector.broadcast %98 : vector<1x256xf32> to vector<8x256xf32>
    %100 = vector.broadcast %96 : vector<8x1xf32> to vector<8x256xf32>
    %101 = arith.mulf %100, %99 : vector<8x256xf32>
    %102 = arith.addf %95, %101 : vector<8x256xf32>
    %103 = vector.extract_strided_slice %75 {offsets = [0, 4], sizes = [8, 1], strides = [1, 1]} : vector<8x8xf32> to vector<8x1xf32>
    %104 = vector.extract_strided_slice %74 {offsets = [4, 0], sizes = [1, 256], strides = [1, 1]} : vector<8x256xf32> to vector<1x256xf32>
    %105 = vector.shape_cast %104 : vector<1x256xf32> to vector<1x256xf32>
    %106 = vector.broadcast %105 : vector<1x256xf32> to vector<8x256xf32>
    %107 = vector.broadcast %103 : vector<8x1xf32> to vector<8x256xf32>
    %108 = arith.mulf %107, %106 : vector<8x256xf32>
    %109 = arith.addf %102, %108 : vector<8x256xf32>
    %110 = vector.extract_strided_slice %75 {offsets = [0, 5], sizes = [8, 1], strides = [1, 1]} : vector<8x8xf32> to vector<8x1xf32>
    %111 = vector.extract_strided_slice %74 {offsets = [5, 0], sizes = [1, 256], strides = [1, 1]} : vector<8x256xf32> to vector<1x256xf32>
    %112 = vector.shape_cast %111 : vector<1x256xf32> to vector<1x256xf32>
    %113 = vector.broadcast %112 : vector<1x256xf32> to vector<8x256xf32>
    %114 = vector.broadcast %110 : vector<8x1xf32> to vector<8x256xf32>
    %115 = arith.mulf %114, %113 : vector<8x256xf32>
    %116 = arith.addf %109, %115 : vector<8x256xf32>
    %117 = vector.extract_strided_slice %75 {offsets = [0, 6], sizes = [8, 1], strides = [1, 1]} : vector<8x8xf32> to vector<8x1xf32>
    %118 = vector.extract_strided_slice %74 {offsets = [6, 0], sizes = [1, 256], strides = [1, 1]} : vector<8x256xf32> to vector<1x256xf32>
    %119 = vector.shape_cast %118 : vector<1x256xf32> to vector<1x256xf32>
    %120 = vector.broadcast %119 : vector<1x256xf32> to vector<8x256xf32>
    %121 = vector.broadcast %117 : vector<8x1xf32> to vector<8x256xf32>
    %122 = arith.mulf %121, %120 : vector<8x256xf32>
    %123 = arith.addf %116, %122 : vector<8x256xf32>
    %124 = vector.extract_strided_slice %75 {offsets = [0, 7], sizes = [8, 1], strides = [1, 1]} : vector<8x8xf32> to vector<8x1xf32>
    %125 = vector.extract_strided_slice %74 {offsets = [7, 0], sizes = [1, 256], strides = [1, 1]} : vector<8x256xf32> to vector<1x256xf32>
    %126 = vector.shape_cast %125 : vector<1x256xf32> to vector<1x256xf32>
    %127 = vector.broadcast %126 : vector<1x256xf32> to vector<8x256xf32>
    %128 = vector.broadcast %124 : vector<8x1xf32> to vector<8x256xf32>
    %129 = arith.mulf %128, %127 : vector<8x256xf32>
    %130 = arith.addf %123, %129 : vector<8x256xf32>
    %131 = vector.extract_strided_slice %7 {offsets = [0, 1], sizes = [8, 1], strides = [1, 1]} : vector<8x6xf32> to vector<8x1xf32>
    %132 = vector.broadcast %131 : vector<8x1xf32> to vector<8x256xf32>
    %133 = arith.addf %130, %132 : vector<8x256xf32>
    %cst_13 = arith.constant 0.000000e+00 : f32
    %134 = vector.broadcast %cst_13 : f32 to vector<8x256xf32>
    %135 = arith.maximumf %133, %134 : vector<8x256xf32>
    %cst_14 = arith.constant 1.000000e+00 : f32
    %136 = vector.broadcast %cst_14 : f32 to vector<8x256xf32>
    %137 = arith.subf %136, %73 : vector<8x256xf32>
    %138 = arith.mulf %5, %137 : vector<8x256xf32>
    %139 = vector.extract_strided_slice %6 {offsets = [16, 0], sizes = [8, 8], strides = [1, 1]} : vector<32x8xf32> to vector<8x8xf32>
    %140 = vector.extract_strided_slice %139 {offsets = [0, 0], sizes = [8, 1], strides = [1, 1]} : vector<8x8xf32> to vector<8x1xf32>
    %141 = vector.extract_strided_slice %138 {offsets = [0, 0], sizes = [1, 256], strides = [1, 1]} : vector<8x256xf32> to vector<1x256xf32>
    %142 = vector.shape_cast %141 : vector<1x256xf32> to vector<1x256xf32>
    %143 = vector.broadcast %142 : vector<1x256xf32> to vector<8x256xf32>
    %144 = vector.broadcast %140 : vector<8x1xf32> to vector<8x256xf32>
    %145 = arith.mulf %144, %143 : vector<8x256xf32>
    %146 = vector.extract_strided_slice %139 {offsets = [0, 1], sizes = [8, 1], strides = [1, 1]} : vector<8x8xf32> to vector<8x1xf32>
    %147 = vector.extract_strided_slice %138 {offsets = [1, 0], sizes = [1, 256], strides = [1, 1]} : vector<8x256xf32> to vector<1x256xf32>
    %148 = vector.shape_cast %147 : vector<1x256xf32> to vector<1x256xf32>
    %149 = vector.broadcast %148 : vector<1x256xf32> to vector<8x256xf32>
    %150 = vector.broadcast %146 : vector<8x1xf32> to vector<8x256xf32>
    %151 = arith.mulf %150, %149 : vector<8x256xf32>
    %152 = arith.addf %145, %151 : vector<8x256xf32>
    %153 = vector.extract_strided_slice %139 {offsets = [0, 2], sizes = [8, 1], strides = [1, 1]} : vector<8x8xf32> to vector<8x1xf32>
    %154 = vector.extract_strided_slice %138 {offsets = [2, 0], sizes = [1, 256], strides = [1, 1]} : vector<8x256xf32> to vector<1x256xf32>
    %155 = vector.shape_cast %154 : vector<1x256xf32> to vector<1x256xf32>
    %156 = vector.broadcast %155 : vector<1x256xf32> to vector<8x256xf32>
    %157 = vector.broadcast %153 : vector<8x1xf32> to vector<8x256xf32>
    %158 = arith.mulf %157, %156 : vector<8x256xf32>
    %159 = arith.addf %152, %158 : vector<8x256xf32>
    %160 = vector.extract_strided_slice %139 {offsets = [0, 3], sizes = [8, 1], strides = [1, 1]} : vector<8x8xf32> to vector<8x1xf32>
    %161 = vector.extract_strided_slice %138 {offsets = [3, 0], sizes = [1, 256], strides = [1, 1]} : vector<8x256xf32> to vector<1x256xf32>
    %162 = vector.shape_cast %161 : vector<1x256xf32> to vector<1x256xf32>
    %163 = vector.broadcast %162 : vector<1x256xf32> to vector<8x256xf32>
    %164 = vector.broadcast %160 : vector<8x1xf32> to vector<8x256xf32>
    %165 = arith.mulf %164, %163 : vector<8x256xf32>
    %166 = arith.addf %159, %165 : vector<8x256xf32>
    %167 = vector.extract_strided_slice %139 {offsets = [0, 4], sizes = [8, 1], strides = [1, 1]} : vector<8x8xf32> to vector<8x1xf32>
    %168 = vector.extract_strided_slice %138 {offsets = [4, 0], sizes = [1, 256], strides = [1, 1]} : vector<8x256xf32> to vector<1x256xf32>
    %169 = vector.shape_cast %168 : vector<1x256xf32> to vector<1x256xf32>
    %170 = vector.broadcast %169 : vector<1x256xf32> to vector<8x256xf32>
    %171 = vector.broadcast %167 : vector<8x1xf32> to vector<8x256xf32>
    %172 = arith.mulf %171, %170 : vector<8x256xf32>
    %173 = arith.addf %166, %172 : vector<8x256xf32>
    %174 = vector.extract_strided_slice %139 {offsets = [0, 5], sizes = [8, 1], strides = [1, 1]} : vector<8x8xf32> to vector<8x1xf32>
    %175 = vector.extract_strided_slice %138 {offsets = [5, 0], sizes = [1, 256], strides = [1, 1]} : vector<8x256xf32> to vector<1x256xf32>
    %176 = vector.shape_cast %175 : vector<1x256xf32> to vector<1x256xf32>
    %177 = vector.broadcast %176 : vector<1x256xf32> to vector<8x256xf32>
    %178 = vector.broadcast %174 : vector<8x1xf32> to vector<8x256xf32>
    %179 = arith.mulf %178, %177 : vector<8x256xf32>
    %180 = arith.addf %173, %179 : vector<8x256xf32>
    %181 = vector.extract_strided_slice %139 {offsets = [0, 6], sizes = [8, 1], strides = [1, 1]} : vector<8x8xf32> to vector<8x1xf32>
    %182 = vector.extract_strided_slice %138 {offsets = [6, 0], sizes = [1, 256], strides = [1, 1]} : vector<8x256xf32> to vector<1x256xf32>
    %183 = vector.shape_cast %182 : vector<1x256xf32> to vector<1x256xf32>
    %184 = vector.broadcast %183 : vector<1x256xf32> to vector<8x256xf32>
    %185 = vector.broadcast %181 : vector<8x1xf32> to vector<8x256xf32>
    %186 = arith.mulf %185, %184 : vector<8x256xf32>
    %187 = arith.addf %180, %186 : vector<8x256xf32>
    %188 = vector.extract_strided_slice %139 {offsets = [0, 7], sizes = [8, 1], strides = [1, 1]} : vector<8x8xf32> to vector<8x1xf32>
    %189 = vector.extract_strided_slice %138 {offsets = [7, 0], sizes = [1, 256], strides = [1, 1]} : vector<8x256xf32> to vector<1x256xf32>
    %190 = vector.shape_cast %189 : vector<1x256xf32> to vector<1x256xf32>
    %191 = vector.broadcast %190 : vector<1x256xf32> to vector<8x256xf32>
    %192 = vector.broadcast %188 : vector<8x1xf32> to vector<8x256xf32>
    %193 = arith.mulf %192, %191 : vector<8x256xf32>
    %194 = arith.addf %187, %193 : vector<8x256xf32>
    %195 = vector.extract_strided_slice %7 {offsets = [0, 2], sizes = [8, 1], strides = [1, 1]} : vector<8x6xf32> to vector<8x1xf32>
    %196 = vector.broadcast %195 : vector<8x1xf32> to vector<8x256xf32>
    %197 = arith.addf %194, %196 : vector<8x256xf32>
    %cst_15 = arith.constant 0.000000e+00 : f32
    %198 = vector.broadcast %cst_15 : f32 to vector<8x256xf32>
    %199 = arith.maximumf %197, %198 : vector<8x256xf32>
    %200 = arith.addf %135, %199 : vector<8x256xf32>
    %201 = vector.extract_strided_slice %6 {offsets = [24, 0], sizes = [8, 8], strides = [1, 1]} : vector<32x8xf32> to vector<8x8xf32>
    %202 = vector.extract_strided_slice %201 {offsets = [0, 0], sizes = [8, 1], strides = [1, 1]} : vector<8x8xf32> to vector<8x1xf32>
    %203 = vector.extract_strided_slice %200 {offsets = [0, 0], sizes = [1, 256], strides = [1, 1]} : vector<8x256xf32> to vector<1x256xf32>
    %204 = vector.shape_cast %203 : vector<1x256xf32> to vector<1x256xf32>
    %205 = vector.broadcast %204 : vector<1x256xf32> to vector<8x256xf32>
    %206 = vector.broadcast %202 : vector<8x1xf32> to vector<8x256xf32>
    %207 = arith.mulf %206, %205 : vector<8x256xf32>
    %208 = vector.extract_strided_slice %201 {offsets = [0, 1], sizes = [8, 1], strides = [1, 1]} : vector<8x8xf32> to vector<8x1xf32>
    %209 = vector.extract_strided_slice %200 {offsets = [1, 0], sizes = [1, 256], strides = [1, 1]} : vector<8x256xf32> to vector<1x256xf32>
    %210 = vector.shape_cast %209 : vector<1x256xf32> to vector<1x256xf32>
    %211 = vector.broadcast %210 : vector<1x256xf32> to vector<8x256xf32>
    %212 = vector.broadcast %208 : vector<8x1xf32> to vector<8x256xf32>
    %213 = arith.mulf %212, %211 : vector<8x256xf32>
    %214 = arith.addf %207, %213 : vector<8x256xf32>
    %215 = vector.extract_strided_slice %201 {offsets = [0, 2], sizes = [8, 1], strides = [1, 1]} : vector<8x8xf32> to vector<8x1xf32>
    %216 = vector.extract_strided_slice %200 {offsets = [2, 0], sizes = [1, 256], strides = [1, 1]} : vector<8x256xf32> to vector<1x256xf32>
    %217 = vector.shape_cast %216 : vector<1x256xf32> to vector<1x256xf32>
    %218 = vector.broadcast %217 : vector<1x256xf32> to vector<8x256xf32>
    %219 = vector.broadcast %215 : vector<8x1xf32> to vector<8x256xf32>
    %220 = arith.mulf %219, %218 : vector<8x256xf32>
    %221 = arith.addf %214, %220 : vector<8x256xf32>
    %222 = vector.extract_strided_slice %201 {offsets = [0, 3], sizes = [8, 1], strides = [1, 1]} : vector<8x8xf32> to vector<8x1xf32>
    %223 = vector.extract_strided_slice %200 {offsets = [3, 0], sizes = [1, 256], strides = [1, 1]} : vector<8x256xf32> to vector<1x256xf32>
    %224 = vector.shape_cast %223 : vector<1x256xf32> to vector<1x256xf32>
    %225 = vector.broadcast %224 : vector<1x256xf32> to vector<8x256xf32>
    %226 = vector.broadcast %222 : vector<8x1xf32> to vector<8x256xf32>
    %227 = arith.mulf %226, %225 : vector<8x256xf32>
    %228 = arith.addf %221, %227 : vector<8x256xf32>
    %229 = vector.extract_strided_slice %201 {offsets = [0, 4], sizes = [8, 1], strides = [1, 1]} : vector<8x8xf32> to vector<8x1xf32>
    %230 = vector.extract_strided_slice %200 {offsets = [4, 0], sizes = [1, 256], strides = [1, 1]} : vector<8x256xf32> to vector<1x256xf32>
    %231 = vector.shape_cast %230 : vector<1x256xf32> to vector<1x256xf32>
    %232 = vector.broadcast %231 : vector<1x256xf32> to vector<8x256xf32>
    %233 = vector.broadcast %229 : vector<8x1xf32> to vector<8x256xf32>
    %234 = arith.mulf %233, %232 : vector<8x256xf32>
    %235 = arith.addf %228, %234 : vector<8x256xf32>
    %236 = vector.extract_strided_slice %201 {offsets = [0, 5], sizes = [8, 1], strides = [1, 1]} : vector<8x8xf32> to vector<8x1xf32>
    %237 = vector.extract_strided_slice %200 {offsets = [5, 0], sizes = [1, 256], strides = [1, 1]} : vector<8x256xf32> to vector<1x256xf32>
    %238 = vector.shape_cast %237 : vector<1x256xf32> to vector<1x256xf32>
    %239 = vector.broadcast %238 : vector<1x256xf32> to vector<8x256xf32>
    %240 = vector.broadcast %236 : vector<8x1xf32> to vector<8x256xf32>
    %241 = arith.mulf %240, %239 : vector<8x256xf32>
    %242 = arith.addf %235, %241 : vector<8x256xf32>
    %243 = vector.extract_strided_slice %201 {offsets = [0, 6], sizes = [8, 1], strides = [1, 1]} : vector<8x8xf32> to vector<8x1xf32>
    %244 = vector.extract_strided_slice %200 {offsets = [6, 0], sizes = [1, 256], strides = [1, 1]} : vector<8x256xf32> to vector<1x256xf32>
    %245 = vector.shape_cast %244 : vector<1x256xf32> to vector<1x256xf32>
    %246 = vector.broadcast %245 : vector<1x256xf32> to vector<8x256xf32>
    %247 = vector.broadcast %243 : vector<8x1xf32> to vector<8x256xf32>
    %248 = arith.mulf %247, %246 : vector<8x256xf32>
    %249 = arith.addf %242, %248 : vector<8x256xf32>
    %250 = vector.extract_strided_slice %201 {offsets = [0, 7], sizes = [8, 1], strides = [1, 1]} : vector<8x8xf32> to vector<8x1xf32>
    %251 = vector.extract_strided_slice %200 {offsets = [7, 0], sizes = [1, 256], strides = [1, 1]} : vector<8x256xf32> to vector<1x256xf32>
    %252 = vector.shape_cast %251 : vector<1x256xf32> to vector<1x256xf32>
    %253 = vector.broadcast %252 : vector<1x256xf32> to vector<8x256xf32>
    %254 = vector.broadcast %250 : vector<8x1xf32> to vector<8x256xf32>
    %255 = arith.mulf %254, %253 : vector<8x256xf32>
    %256 = arith.addf %249, %255 : vector<8x256xf32>
    %257 = vector.extract_strided_slice %7 {offsets = [0, 3], sizes = [8, 1], strides = [1, 1]} : vector<8x6xf32> to vector<8x1xf32>
    %258 = vector.broadcast %257 : vector<8x1xf32> to vector<8x256xf32>
    %259 = arith.addf %256, %258 : vector<8x256xf32>
    %cst_16 = arith.constant 0.000000e+00 : f32
    %260 = vector.broadcast %cst_16 : f32 to vector<8x256xf32>
    %261 = arith.maximumf %259, %260 : vector<8x256xf32>
    %262 = vector.extract_strided_slice %7 {offsets = [0, 4], sizes = [8, 1], strides = [1, 1]} : vector<8x6xf32> to vector<8x1xf32>
    %263 = arith.addf %261, %1 : vector<8x256xf32>
    %264 = vector.broadcast %262 : vector<8x1xf32> to vector<8x256xf32>
    %265 = arith.mulf %264, %263 : vector<8x256xf32>
    %266 = vector.extract_strided_slice %7 {offsets = [0, 5], sizes = [8, 1], strides = [1, 1]} : vector<8x6xf32> to vector<8x1xf32>
    %267 = vector.broadcast %266 : vector<8x1xf32> to vector<8x256xf32>
    %268 = arith.addf %265, %267 : vector<8x256xf32>
    %cst_17 = arith.constant 0.000000e+00 : f32
    %269 = vector.broadcast %cst_17 : f32 to vector<8x256xf32>
    %270 = arith.maximumf %268, %269 : vector<8x256xf32>
    %271 = vector.shape_cast %270 : vector<8x256xf32> to vector<1x8x256xf32>
    %c0_18 = arith.constant 0 : index
    %c0_19 = arith.constant 0 : index
    %c0_20 = arith.constant 0 : index
    %272 = vector.load %arg7[%c0_18, %c0_19, %c0_20] : memref<1x8x256xf32, #tpu.memory_space<vmem>>, vector<1x8x256xf32>
    tpu.vector_store %arg7[%c0_18, %c0_19, %c0_20], %271 {strides = array<i32>} : memref<1x8x256xf32, #tpu.memory_space<vmem>>, vector<1x8x256xf32>,
    return
  }
  func.func @transform_0(%arg0: i32, %arg1: i32) -> (i32, i32) {
    %c0_i32 = arith.constant 0 : i32
    %c0_i32_0 = arith.constant 0 : i32
    %c0_i32_1 = arith.constant 0 : i32
    return %c0_i32, %c0_i32_0 : i32, i32
  }
  func.func @transform_1(%arg0: i32, %arg1: i32) -> (i32, i32) {
    %c0_i32 = arith.constant 0 : i32
    %c0_i32_0 = arith.constant 0 : i32
    %c0_i32_1 = arith.constant 0 : i32
    return %c0_i32, %c0_i32_0 : i32, i32
  }
  func.func @transform_2(%arg0: i32, %arg1: i32) -> (i32, i32, i32) {
    %c0_i32 = arith.constant 0 : i32
    %c0_i32_0 = arith.constant 0 : i32
    return %arg0, %c0_i32, %arg1 : i32, i32, i32
  }
  func.func @transform_3(%arg0: i32, %arg1: i32) -> (i32, i32, i32) {
    %c0_i32 = arith.constant 0 : i32
    %c0_i32_0 = arith.constant 0 : i32
    return %arg0, %c0_i32, %arg1 : i32, i32, i32
  }
  func.func @transform_4(%arg0: i32, %arg1: i32) -> (i32, i32, i32) {
    %c0_i32 = arith.constant 0 : i32
    %c0_i32_0 = arith.constant 0 : i32
    return %arg0, %c0_i32, %arg1 : i32, i32, i32
  }
  func.func @transform_5(%arg0: i32, %arg1: i32) -> (i32, i32, i32) {
    %c0_i32 = arith.constant 0 : i32
    %c0_i32_0 = arith.constant 0 : i32
    return %arg0, %c0_i32, %arg1 : i32, i32, i32
  }
}

</mosaic_0001>

<llo_original>
// kernel: tpu_custom_call.1
$region0: #{tpu_custom_call.1}
  #allocation0 [shape = 'u32[]', space=smem, size = 0x4, offset = 0x4, fixed_abs, tag = 'smem constant byte address 0x4 - core index']
  #allocation1 [shape = 'u32[144,128]{1,0:T(1,128)}', space=vmem, size = 0x12000, scoped, tag = 'internal scratch']
  %s0 = inlined_call_operand.vmem [shape: f32[32,8], index: 0, kind: input, shape index: {}]
  %s1 = inlined_call_operand.vmem [shape: f32[8,6], index: 1, kind: input, shape index: {}]
  %s2 = inlined_call_operand.vmem [shape: f32[1,8,256], index: 2, kind: input, shape index: {}]
  %s3 = inlined_call_operand.vmem [shape: f32[1,8,256], index: 3, kind: input, shape index: {}]
  %s4 = inlined_call_operand.hbm [shape: f32[1,8,256], index: 4, kind: input, shape index: {}]
  %s5 = inlined_call_operand.hbm [shape: f32[1,8,256], index: 5, kind: output, shape index: {}]
  %s6 = sld [smem:[#allocation0]]
  $region34: #{tpu_custom_call.1} parent=0
    _
  %s8 = ssub.s32 1, %s6
  %s9 = scalar_select 0, %s8, %s6
  $region1: #{tpu_custom_call.1} parent=0
    #allocation2 [shape = 'u8[8192]{0}', space=vmem, size = 0x2000, scoped, tag = 'input window, operand 4, single buffered']
    #allocation3 [shape = 's32[1]{0}', space=sflag, size = 0x4, scoped, tag = 'scoped memory for tpu_custom_call.1']
    #allocation4 [shape = 's32[1]{0}', space=sflag, size = 0x4, scoped, tag = 'scoped memory for tpu_custom_call.1']
    #allocation5 [shape = 'u8[8192]{0}', space=vmem, size = 0x2000, scoped, tag = 'output window, operand 0, single buffered']
    %10 = vsyncpa [#allocation3], 0
    %11 = vsyncpa [#allocation4], 0
    // Predicated region
    $region2: #{tpu_custom_call.1} parent=1 // pred_check
      _
    $region3: #{tpu_custom_call.1} parent=1 // pred_check_branch
      %13 = sbr.rel (0) target = $region5
    $region4: #{tpu_custom_call.1} parent=1 // pred_region
      _
    $region5: #{tpu_custom_call.1} parent=1 // pred_fallthru
      _
    // Predicated region
    $region6: #{tpu_custom_call.1} parent=1 // pred_check
      _
    $region7: #{tpu_custom_call.1} parent=1 // pred_check_branch
      %15 = sbr.rel (0) target = $region9
    $region8: #{tpu_custom_call.1} parent=1 // pred_region
      _
    $region9: #{tpu_custom_call.1} parent=1 // pred_fallthru
      _
    // Predicated region
    $region10: #{tpu_custom_call.1} parent=1 // pred_check
      _
    $region11: #{tpu_custom_call.1} parent=1 // pred_check_branch
      %17 = sbr.rel (0) target = $region13
    $region12: #{tpu_custom_call.1} parent=1 // pred_region
      _
    $region13: #{tpu_custom_call.1} parent=1 // pred_fallthru
      _
    // Predicated region
    $region14: #{tpu_custom_call.1} parent=1 // pred_check
      _
    $region15: #{tpu_custom_call.1} parent=1 // pred_check_branch
      %19 = sbr.rel (0) target = $region17
    $region16: #{tpu_custom_call.1} parent=1 // pred_region
      _
    $region17: #{tpu_custom_call.1} parent=1 // pred_fallthru
      _
    // Predicated region
    $region18: #{tpu_custom_call.1} parent=1 // pred_check
      _
    $region19: #{tpu_custom_call.1} parent=1 // pred_check_branch
      %21 = sbr.rel (0) target = $region21
    $region20: #{tpu_custom_call.1} parent=1 // pred_region
      %s23 = ssub.s32 256, 256
      %24 = vsyncadd [#allocation3], %s23
      %s26 = sshll.u32 [#allocation2], 4
      %s27 = int_to_ptr.vmem [resolvable:$true] %s26
      %29 = dma.hbm_to_vmem [thread:$0]  %s4, 256, %s27, [#allocation3]
    $region21: #{tpu_custom_call.1} parent=1 // pred_fallthru
      _
    // Predicated region
    $region22: #{tpu_custom_call.1} parent=1 // pred_check
      _
    $region23: #{tpu_custom_call.1} parent=1 // pred_check_branch
      %31 = sbr.rel (0) target = $region25
    $region24: #{tpu_custom_call.1} parent=1 // pred_region
      %32 = dma.done [#allocation3], 256
    $region25: #{tpu_custom_call.1} parent=1 // pred_fallthru
      _
    %v33 = vld [vmem:[%s2] sm:$0xff]
    %v34 = vld [vmem:[%s2 + $0x8] sm:$0xff]
    %v35 = vld [vmem:[%s3] sm:$0xff]
    %v36 = vld [vmem:[%s3 + $0x8] sm:$0xff]
    %v37 = vld [vmem:[#allocation2] sm:$0xff]
    %v38 = vld [vmem:[#allocation2 + $0x8] sm:$0xff]
    %v39 = vld [vmem:[%s0] sm:$0xff]
    %v40 = vld [vmem:[%s0 + $0x8] sm:$0xff]
    %v41 = vld [vmem:[%s0 + $0x10] sm:$0xff]
    %v42 = vld [vmem:[%s0 + $0x18] sm:$0xff]
    %v43 = vld [vmem:[%s1] sm:$0xff]
    %v44 = vlaneseq
    %v45 = vshrl.u32 %v44, 7
    %v46 = vsub.s32 0, %v45
    %v47 = vrot.slane %v33, %v46
    %v48 = vlaneseq
    %v49 = vshrl.u32 %v48, 7
    %v50 = vsub.s32 0, %v49
    %v51 = vrot.slane %v34, %v50
    %53 = vset.pattern.permute.xlu0 0
    %54 = vperm.xlu0 %53, %v39
    %v55 = vpop.permute.xlu0 %54
    %v57 = vmul.f32 %v55, %v47
    %v58 = vmul.f32 %v55, %v51
    %v59 = vlaneseq
    %v60 = vshrl.u32 %v59, 7
    %v61 = vsub.s32 1, %v60
    %v62 = vrot.slane %v33, %v61
    %v63 = vlaneseq
    %v64 = vshrl.u32 %v63, 7
    %v65 = vsub.s32 1, %v64
    %v66 = vrot.slane %v34, %v65
    %67 = vset.pattern.permute.xlu0 1
    %68 = vperm.xlu0 %67, %v39
    %v69 = vpop.permute.xlu0 %68
    %v71 = vmul.f32 %v69, %v62
    %v72 = vmul.f32 %v69, %v66
    %v73 = vadd.f32 %v57, %v71
    %v74 = vadd.f32 %v58, %v72
    %v75 = vlaneseq
    %v76 = vshrl.u32 %v75, 7
    %v77 = vsub.s32 2, %v76
    %v78 = vrot.slane %v33, %v77
    %v79 = vlaneseq
    %v80 = vshrl.u32 %v79, 7
    %v81 = vsub.s32 2, %v80
    %v82 = vrot.slane %v34, %v81
    %83 = vset.pattern.permute.xlu0 2
    %84 = vperm.xlu0 %83, %v39
    %v85 = vpop.permute.xlu0 %84
    %v87 = vmul.f32 %v85, %v78
    %v88 = vmul.f32 %v85, %v82
    %v89 = vadd.f32 %v73, %v87
    %v90 = vadd.f32 %v74, %v88
    %v91 = vlaneseq
    %v92 = vshrl.u32 %v91, 7
    %v93 = vsub.s32 3, %v92
    %v94 = vrot.slane %v33, %v93
    %v95 = vlaneseq
    %v96 = vshrl.u32 %v95, 7
    %v97 = vsub.s32 3, %v96
    %v98 = vrot.slane %v34, %v97
    %99 = vset.pattern.permute.xlu0 3
    %100 = vperm.xlu0 %99, %v39
    %v101 = vpop.permute.xlu0 %100
    %v103 = vmul.f32 %v101, %v94
    %v104 = vmul.f32 %v101, %v98
    %v105 = vadd.f32 %v89, %v103
    %v106 = vadd.f32 %v90, %v104
    %v107 = vlaneseq
    %v108 = vshrl.u32 %v107, 7
    %v109 = vsub.s32 4, %v108
    %v110 = vrot.slane %v33, %v109
    %v111 = vlaneseq
    %v112 = vshrl.u32 %v111, 7
    %v113 = vsub.s32 4, %v112
    %v114 = vrot.slane %v34, %v113
    %115 = vset.pattern.permute.xlu0 4
    %116 = vperm.xlu0 %115, %v39
    %v117 = vpop.permute.xlu0 %116
    %v119 = vmul.f32 %v117, %v110
    %v120 = vmul.f32 %v117, %v114
    %v121 = vadd.f32 %v105, %v119
    %v122 = vadd.f32 %v106, %v120
    %v123 = vlaneseq
    %v124 = vshrl.u32 %v123, 7
    %v125 = vsub.s32 5, %v124
    %v126 = vrot.slane %v33, %v125
    %v127 = vlaneseq
    %v128 = vshrl.u32 %v127, 7
    %v129 = vsub.s32 5, %v128
    %v130 = vrot.slane %v34, %v129
    %131 = vset.pattern.permute.xlu0 5
    %132 = vperm.xlu0 %131, %v39
    %v133 = vpop.permute.xlu0 %132
    %v135 = vmul.f32 %v133, %v126
    %v136 = vmul.f32 %v133, %v130
    %v137 = vadd.f32 %v121, %v135
    %v138 = vadd.f32 %v122, %v136
    %v139 = vlaneseq
    %v140 = vshrl.u32 %v139, 7
    %v141 = vsub.s32 6, %v140
    %v142 = vrot.slane %v33, %v141
    %v143 = vlaneseq
    %v144 = vshrl.u32 %v143, 7
    %v145 = vsub.s32 6, %v144
    %v146 = vrot.slane %v34, %v145
    %147 = vset.pattern.permute.xlu0 6
    %148 = vperm.xlu0 %147, %v39
    %v149 = vpop.permute.xlu0 %148
    %v151 = vmul.f32 %v149, %v142
    %v152 = vmul.f32 %v149, %v146
    %v153 = vadd.f32 %v137, %v151
    %v154 = vadd.f32 %v138, %v152
    %v155 = vlaneseq
    %v156 = vshrl.u32 %v155, 7
    %v157 = vsub.s32 7, %v156
    %v158 = vrot.slane %v33, %v157
    %v159 = vlaneseq
    %v160 = vshrl.u32 %v159, 7
    %v161 = vsub.s32 7, %v160
    %v162 = vrot.slane %v34, %v161
    %163 = vset.pattern.permute.xlu0 7
    %164 = vperm.xlu0 %163, %v39
    %v165 = vpop.permute.xlu0 %164
    %v167 = vmul.f32 %v165, %v158
    %v168 = vmul.f32 %v165, %v162
    %v169 = vadd.f32 %v153, %v167
    %v170 = vadd.f32 %v154, %v168
    %172 = vset.pattern.permute.xlu0 0
    %173 = vperm.xlu0 %172, %v43
    %v174 = vpop.permute.xlu0 %173
    %v176 = vadd.f32 %v169, %v174
    %v177 = vadd.f32 %v170, %v174
    %v178 = vmax.f32 %v176, 0.0
    %v179 = vmax.f32 %v177, 0.0
    %v180 = vxor.u32 %v178, 2147483648
    %v181 = vxor.u32 %v179, 2147483648
    %v182 = vmul.f32 %v180, 1.442695
    %v183 = vpow.pop %v182
    %v184 = vmul.f32 %v181, 1.442695
    %v185 = vpow.pop %v184
    %v186 = vadd.f32 %v183, 1.0
    %v187 = vadd.f32 %v185, 1.0
    %v188 = vrcp.pop %v186
    %v189 = vmul.f32 1.0, %v188
    %v190 = vrcp.pop %v187
    %v191 = vmul.f32 1.0, %v190
    %v192 = vmul.f32 %v35, %v189
    %v193 = vmul.f32 %v36, %v191
    %v194 = vlaneseq
    %v195 = vshrl.u32 %v194, 7
    %v196 = vsub.s32 0, %v195
    %v197 = vrot.slane %v192, %v196
    %v198 = vlaneseq
    %v199 = vshrl.u32 %v198, 7
    %v200 = vsub.s32 0, %v199
    %v201 = vrot.slane %v193, %v200
    %203 = vset.pattern.permute.xlu0 0
    %204 = vperm.xlu0 %203, %v40
    %v205 = vpop.permute.xlu0 %204
    %v207 = vmul.f32 %v205, %v197
    %v208 = vmul.f32 %v205, %v201
    %v209 = vlaneseq
    %v210 = vshrl.u32 %v209, 7
    %v211 = vsub.s32 1, %v210
    %v212 = vrot.slane %v192, %v211
    %v213 = vlaneseq
    %v214 = vshrl.u32 %v213, 7
    %v215 = vsub.s32 1, %v214
    %v216 = vrot.slane %v193, %v215
    %217 = vset.pattern.permute.xlu0 1
    %218 = vperm.xlu0 %217, %v40
    %v219 = vpop.permute.xlu0 %218
    %v221 = vmul.f32 %v219, %v212
    %v222 = vmul.f32 %v219, %v216
    %v223 = vadd.f32 %v207, %v221
    %v224 = vadd.f32 %v208, %v222
    %v225 = vlaneseq
    %v226 = vshrl.u32 %v225, 7
    %v227 = vsub.s32 2, %v226
    %v228 = vrot.slane %v192, %v227
    %v229 = vlaneseq
    %v230 = vshrl.u32 %v229, 7
    %v231 = vsub.s32 2, %v230
    %v232 = vrot.slane %v193, %v231
    %233 = vset.pattern.permute.xlu0 2
    %234 = vperm.xlu0 %233, %v40
    %v235 = vpop.permute.xlu0 %234
    %v237 = vmul.f32 %v235, %v228
    %v238 = vmul.f32 %v235, %v232
    %v239 = vadd.f32 %v223, %v237
    %v240 = vadd.f32 %v224, %v238
    %v241 = vlaneseq
    %v242 = vshrl.u32 %v241, 7
    %v243 = vsub.s32 3, %v242
    %v244 = vrot.slane %v192, %v243
    %v245 = vlaneseq
    %v246 = vshrl.u32 %v245, 7
    %v247 = vsub.s32 3, %v246
    %v248 = vrot.slane %v193, %v247
    %249 = vset.pattern.permute.xlu0 3
    %250 = vperm.xlu0 %249, %v40
    %v251 = vpop.permute.xlu0 %250
    %v253 = vmul.f32 %v251, %v244
    %v254 = vmul.f32 %v251, %v248
    %v255 = vadd.f32 %v239, %v253
    %v256 = vadd.f32 %v240, %v254
    %v257 = vlaneseq
    %v258 = vshrl.u32 %v257, 7
    %v259 = vsub.s32 4, %v258
    %v260 = vrot.slane %v192, %v259
    %v261 = vlaneseq
    %v262 = vshrl.u32 %v261, 7
    %v263 = vsub.s32 4, %v262
    %v264 = vrot.slane %v193, %v263
    %265 = vset.pattern.permute.xlu0 4
    %266 = vperm.xlu0 %265, %v40
    %v267 = vpop.permute.xlu0 %266
    %v269 = vmul.f32 %v267, %v260
    %v270 = vmul.f32 %v267, %v264
    %v271 = vadd.f32 %v255, %v269
    %v272 = vadd.f32 %v256, %v270
    %v273 = vlaneseq
    %v274 = vshrl.u32 %v273, 7
    %v275 = vsub.s32 5, %v274
    %v276 = vrot.slane %v192, %v275
    %v277 = vlaneseq
    %v278 = vshrl.u32 %v277, 7
    %v279 = vsub.s32 5, %v278
    %v280 = vrot.slane %v193, %v279
    %281 = vset.pattern.permute.xlu0 5
    %282 = vperm.xlu0 %281, %v40
    %v283 = vpop.permute.xlu0 %282
    %v285 = vmul.f32 %v283, %v276
    %v286 = vmul.f32 %v283, %v280
    %v287 = vadd.f32 %v271, %v285
    %v288 = vadd.f32 %v272, %v286
    %v289 = vlaneseq
    %v290 = vshrl.u32 %v289, 7
    %v291 = vsub.s32 6, %v290
    %v292 = vrot.slane %v192, %v291
    %v293 = vlaneseq
    %v294 = vshrl.u32 %v293, 7
    %v295 = vsub.s32 6, %v294
    %v296 = vrot.slane %v193, %v295
    %297 = vset.pattern.permute.xlu0 6
    %298 = vperm.xlu0 %297, %v40
    %v299 = vpop.permute.xlu0 %298
    %v301 = vmul.f32 %v299, %v292
    %v302 = vmul.f32 %v299, %v296
    %v303 = vadd.f32 %v287, %v301
    %v304 = vadd.f32 %v288, %v302
    %v305 = vlaneseq
    %v306 = vshrl.u32 %v305, 7
    %v307 = vsub.s32 7, %v306
    %v308 = vrot.slane %v192, %v307
    %v309 = vlaneseq
    %v310 = vshrl.u32 %v309, 7
    %v311 = vsub.s32 7, %v310
    %v312 = vrot.slane %v193, %v311
    %313 = vset.pattern.permute.xlu0 7
    %314 = vperm.xlu0 %313, %v40
    %v315 = vpop.permute.xlu0 %314
    %v317 = vmul.f32 %v315, %v308
    %v318 = vmul.f32 %v315, %v312
    %v319 = vadd.f32 %v303, %v317
    %v320 = vadd.f32 %v304, %v318
    %321 = vset.pattern.permute.xlu0 1
    %322 = vperm.xlu0 %321, %v43
    %v323 = vpop.permute.xlu0 %322
    %v325 = vadd.f32 %v319, %v323
    %v326 = vadd.f32 %v320, %v323
    %v327 = vmax.f32 %v325, 0.0
    %v328 = vmax.f32 %v326, 0.0
    %v329 = vsub.f32 1.0, %v189
    %v330 = vsub.f32 1.0, %v191
    %v331 = vmul.f32 %v37, %v329
    %v332 = vmul.f32 %v38, %v330
    %v333 = vlaneseq
    %v334 = vshrl.u32 %v333, 7
    %v335 = vsub.s32 0, %v334
    %v336 = vrot.slane %v331, %v335
    %v337 = vlaneseq
    %v338 = vshrl.u32 %v337, 7
    %v339 = vsub.s32 0, %v338
    %v340 = vrot.slane %v332, %v339
    %342 = vset.pattern.permute.xlu0 0
    %343 = vperm.xlu0 %342, %v41
    %v344 = vpop.permute.xlu0 %343
    %v346 = vmul.f32 %v344, %v336
    %v347 = vmul.f32 %v344, %v340
    %v348 = vlaneseq
    %v349 = vshrl.u32 %v348, 7
    %v350 = vsub.s32 1, %v349
    %v351 = vrot.slane %v331, %v350
    %v352 = vlaneseq
    %v353 = vshrl.u32 %v352, 7
    %v354 = vsub.s32 1, %v353
    %v355 = vrot.slane %v332, %v354
    %356 = vset.pattern.permute.xlu0 1
    %357 = vperm.xlu0 %356, %v41
    %v358 = vpop.permute.xlu0 %357
    %v360 = vmul.f32 %v358, %v351
    %v361 = vmul.f32 %v358, %v355
    %v362 = vadd.f32 %v346, %v360
    %v363 = vadd.f32 %v347, %v361
    %v364 = vlaneseq
    %v365 = vshrl.u32 %v364, 7
    %v366 = vsub.s32 2, %v365
    %v367 = vrot.slane %v331, %v366
    %v368 = vlaneseq
    %v369 = vshrl.u32 %v368, 7
    %v370 = vsub.s32 2, %v369
    %v371 = vrot.slane %v332, %v370
    %372 = vset.pattern.permute.xlu0 2
    %373 = vperm.xlu0 %372, %v41
    %v374 = vpop.permute.xlu0 %373
    %v376 = vmul.f32 %v374, %v367
    %v377 = vmul.f32 %v374, %v371
    %v378 = vadd.f32 %v362, %v376
    %v379 = vadd.f32 %v363, %v377
    %v380 = vlaneseq
    %v381 = vshrl.u32 %v380, 7
    %v382 = vsub.s32 3, %v381
    %v383 = vrot.slane %v331, %v382
    %v384 = vlaneseq
    %v385 = vshrl.u32 %v384, 7
    %v386 = vsub.s32 3, %v385
    %v387 = vrot.slane %v332, %v386
    %388 = vset.pattern.permute.xlu0 3
    %389 = vperm.xlu0 %388, %v41
    %v390 = vpop.permute.xlu0 %389
    %v392 = vmul.f32 %v390, %v383
    %v393 = vmul.f32 %v390, %v387
    %v394 = vadd.f32 %v378, %v392
    %v395 = vadd.f32 %v379, %v393
    %v396 = vlaneseq
    %v397 = vshrl.u32 %v396, 7
    %v398 = vsub.s32 4, %v397
    %v399 = vrot.slane %v331, %v398
    %v400 = vlaneseq
    %v401 = vshrl.u32 %v400, 7
    %v402 = vsub.s32 4, %v401
    %v403 = vrot.slane %v332, %v402
    %404 = vset.pattern.permute.xlu0 4
    %405 = vperm.xlu0 %404, %v41
    %v406 = vpop.permute.xlu0 %405
    %v408 = vmul.f32 %v406, %v399
    %v409 = vmul.f32 %v406, %v403
    %v410 = vadd.f32 %v394, %v408
    %v411 = vadd.f32 %v395, %v409
    %v412 = vlaneseq
    %v413 = vshrl.u32 %v412, 7
    %v414 = vsub.s32 5, %v413
    %v415 = vrot.slane %v331, %v414
    %v416 = vlaneseq
    %v417 = vshrl.u32 %v416, 7
    %v418 = vsub.s32 5, %v417
    %v419 = vrot.slane %v332, %v418
    %420 = vset.pattern.permute.xlu0 5
    %421 = vperm.xlu0 %420, %v41
    %v422 = vpop.permute.xlu0 %421
    %v424 = vmul.f32 %v422, %v415
    %v425 = vmul.f32 %v422, %v419
    %v426 = vadd.f32 %v410, %v424
    %v427 = vadd.f32 %v411, %v425
    %v428 = vlaneseq
    %v429 = vshrl.u32 %v428, 7
    %v430 = vsub.s32 6, %v429
    %v431 = vrot.slane %v331, %v430
    %v432 = vlaneseq
    %v433 = vshrl.u32 %v432, 7
    %v434 = vsub.s32 6, %v433
    %v435 = vrot.slane %v332, %v434
    %436 = vset.pattern.permute.xlu0 6
    %437 = vperm.xlu0 %436, %v41
    %v438 = vpop.permute.xlu0 %437
    %v440 = vmul.f32 %v438, %v431
    %v441 = vmul.f32 %v438, %v435
    %v442 = vadd.f32 %v426, %v440
    %v443 = vadd.f32 %v427, %v441
    %v444 = vlaneseq
    %v445 = vshrl.u32 %v444, 7
    %v446 = vsub.s32 7, %v445
    %v447 = vrot.slane %v331, %v446
    %v448 = vlaneseq
    %v449 = vshrl.u32 %v448, 7
    %v450 = vsub.s32 7, %v449
    %v451 = vrot.slane %v332, %v450
    %452 = vset.pattern.permute.xlu0 7
    %453 = vperm.xlu0 %452, %v41
    %v454 = vpop.permute.xlu0 %453
    %v456 = vmul.f32 %v454, %v447
    %v457 = vmul.f32 %v454, %v451
    %v458 = vadd.f32 %v442, %v456
    %v459 = vadd.f32 %v443, %v457
    %460 = vset.pattern.permute.xlu0 2
    %461 = vperm.xlu0 %460, %v43
    %v462 = vpop.permute.xlu0 %461
    %v464 = vadd.f32 %v458, %v462
    %v465 = vadd.f32 %v459, %v462
    %v466 = vmax.f32 %v464, 0.0
    %v467 = vmax.f32 %v465, 0.0
    %v468 = vadd.f32 %v327, %v466
    %v469 = vadd.f32 %v328, %v467
    %v470 = vlaneseq
    %v471 = vshrl.u32 %v470, 7
    %v472 = vsub.s32 0, %v471
    %v473 = vrot.slane %v468, %v472
    %v474 = vlaneseq
    %v475 = vshrl.u32 %v474, 7
    %v476 = vsub.s32 0, %v475
    %v477 = vrot.slane %v469, %v476
    %479 = vset.pattern.permute.xlu0 0
    %480 = vperm.xlu0 %479, %v42
    %v481 = vpop.permute.xlu0 %480
    %v483 = vmul.f32 %v481, %v473
    %v484 = vmul.f32 %v481, %v477
    %v485 = vlaneseq
    %v486 = vshrl.u32 %v485, 7
    %v487 = vsub.s32 1, %v486
    %v488 = vrot.slane %v468, %v487
    %v489 = vlaneseq
    %v490 = vshrl.u32 %v489, 7
    %v491 = vsub.s32 1, %v490
    %v492 = vrot.slane %v469, %v491
    %493 = vset.pattern.permute.xlu0 1
    %494 = vperm.xlu0 %493, %v42
    %v495 = vpop.permute.xlu0 %494
    %v497 = vmul.f32 %v495, %v488
    %v498 = vmul.f32 %v495, %v492
    %v499 = vadd.f32 %v483, %v497
    %v500 = vadd.f32 %v484, %v498
    %v501 = vlaneseq
    %v502 = vshrl.u32 %v501, 7
    %v503 = vsub.s32 2, %v502
    %v504 = vrot.slane %v468, %v503
    %v505 = vlaneseq
    %v506 = vshrl.u32 %v505, 7
    %v507 = vsub.s32 2, %v506
    %v508 = vrot.slane %v469, %v507
    %509 = vset.pattern.permute.xlu0 2
    %510 = vperm.xlu0 %509, %v42
    %v511 = vpop.permute.xlu0 %510
    %v513 = vmul.f32 %v511, %v504
    %v514 = vmul.f32 %v511, %v508
    %v515 = vadd.f32 %v499, %v513
    %v516 = vadd.f32 %v500, %v514
    %v517 = vlaneseq
    %v518 = vshrl.u32 %v517, 7
    %v519 = vsub.s32 3, %v518
    %v520 = vrot.slane %v468, %v519
    %v521 = vlaneseq
    %v522 = vshrl.u32 %v521, 7
    %v523 = vsub.s32 3, %v522
    %v524 = vrot.slane %v469, %v523
    %525 = vset.pattern.permute.xlu0 3
    %526 = vperm.xlu0 %525, %v42
    %v527 = vpop.permute.xlu0 %526
    %v529 = vmul.f32 %v527, %v520
    %v530 = vmul.f32 %v527, %v524
    %v531 = vadd.f32 %v515, %v529
    %v532 = vadd.f32 %v516, %v530
    %v533 = vlaneseq
    %v534 = vshrl.u32 %v533, 7
    %v535 = vsub.s32 4, %v534
    %v536 = vrot.slane %v468, %v535
    %v537 = vlaneseq
    %v538 = vshrl.u32 %v537, 7
    %v539 = vsub.s32 4, %v538
    %v540 = vrot.slane %v469, %v539
    %541 = vset.pattern.permute.xlu0 4
    %542 = vperm.xlu0 %541, %v42
    %v543 = vpop.permute.xlu0 %542
    %v545 = vmul.f32 %v543, %v536
    %v546 = vmul.f32 %v543, %v540
    %v547 = vadd.f32 %v531, %v545
    %v548 = vadd.f32 %v532, %v546
    %v549 = vlaneseq
    %v550 = vshrl.u32 %v549, 7
    %v551 = vsub.s32 5, %v550
    %v552 = vrot.slane %v468, %v551
    %v553 = vlaneseq
    %v554 = vshrl.u32 %v553, 7
    %v555 = vsub.s32 5, %v554
    %v556 = vrot.slane %v469, %v555
    %557 = vset.pattern.permute.xlu0 5
    %558 = vperm.xlu0 %557, %v42
    %v559 = vpop.permute.xlu0 %558
    %v561 = vmul.f32 %v559, %v552
    %v562 = vmul.f32 %v559, %v556
    %v563 = vadd.f32 %v547, %v561
    %v564 = vadd.f32 %v548, %v562
    %v565 = vlaneseq
    %v566 = vshrl.u32 %v565, 7
    %v567 = vsub.s32 6, %v566
    %v568 = vrot.slane %v468, %v567
    %v569 = vlaneseq
    %v570 = vshrl.u32 %v569, 7
    %v571 = vsub.s32 6, %v570
    %v572 = vrot.slane %v469, %v571
    %573 = vset.pattern.permute.xlu0 6
    %574 = vperm.xlu0 %573, %v42
    %v575 = vpop.permute.xlu0 %574
    %v577 = vmul.f32 %v575, %v568
    %v578 = vmul.f32 %v575, %v572
    %v579 = vadd.f32 %v563, %v577
    %v580 = vadd.f32 %v564, %v578
    %v581 = vlaneseq
    %v582 = vshrl.u32 %v581, 7
    %v583 = vsub.s32 7, %v582
    %v584 = vrot.slane %v468, %v583
    %v585 = vlaneseq
    %v586 = vshrl.u32 %v585, 7
    %v587 = vsub.s32 7, %v586
    %v588 = vrot.slane %v469, %v587
    %589 = vset.pattern.permute.xlu0 7
    %590 = vperm.xlu0 %589, %v42
    %v591 = vpop.permute.xlu0 %590
    %v593 = vmul.f32 %v591, %v584
    %v594 = vmul.f32 %v591, %v588
    %v595 = vadd.f32 %v579, %v593
    %v596 = vadd.f32 %v580, %v594
    %597 = vset.pattern.permute.xlu0 3
    %598 = vperm.xlu0 %597, %v43
    %v599 = vpop.permute.xlu0 %598
    %v601 = vadd.f32 %v595, %v599
    %v602 = vadd.f32 %v596, %v599
    %v603 = vmax.f32 %v601, 0.0
    %v604 = vmax.f32 %v602, 0.0
    %v605 = vadd.f32 %v603, %v33
    %v606 = vadd.f32 %v604, %v34
    %607 = vset.pattern.permute.xlu0 4
    %608 = vperm.xlu0 %607, %v43
    %v609 = vpop.permute.xlu0 %608
    %v611 = vmul.f32 %v609, %v605
    %v612 = vmul.f32 %v609, %v606
    %613 = vset.pattern.permute.xlu0 5
    %614 = vperm.xlu0 %613, %v43
    %v615 = vpop.permute.xlu0 %614
    %v617 = vadd.f32 %v611, %v615
    %v618 = vadd.f32 %v612, %v615
    %v619 = vmax.f32 %v617, 0.0
    %v620 = vmax.f32 %v618, 0.0
    %621 = vst [vmem:[#allocation5] sm:$0xff] %v619
    %622 = vst [vmem:[#allocation5 + $0x8] sm:$0xff] %v620
    // Predicated region
    $region26: #{tpu_custom_call.1} parent=1 // pred_check
      _
    $region27: #{tpu_custom_call.1} parent=1 // pred_check_branch
      %624 = sbr.rel (0) target = $region29
    $region28: #{tpu_custom_call.1} parent=1 // pred_region
      %s626 = ssub.s32 256, 256
      %627 = vsyncadd [#allocation4], %s626
      %s629 = sshll.u32 [#allocation5], 4
      %s630 = int_to_ptr.vmem [resolvable:$true] %s629
      %632 = dma.vmem_to_hbm [thread:$0]  %s630, 256, %s5, [#allocation4]
    $region29: #{tpu_custom_call.1} parent=1 // pred_fallthru
      _
    // Predicated region
    $region30: #{tpu_custom_call.1} parent=1 // pred_check
      _
    $region31: #{tpu_custom_call.1} parent=1 // pred_check_branch
      %634 = sbr.rel (0) target = $region33
    $region32: #{tpu_custom_call.1} parent=1 // pred_region
      %635 = dma.done [#allocation4], 256
    $region33: #{tpu_custom_call.1} parent=1 // pred_fallthru
      _
    %636 = vsyncpa [#allocation3], 1
    %637 = vsyncpa [#allocation4], 1

</llo_original>
